<compile_context>
chip_gen: v7x
topology: tpu7x:2x2x1
jax: 0.10.0
libtpu: 0.0.40
codegen_flags: <defaults>
</compile_context>

<pallas_src>
import jax
import jax.numpy as jnp
import numpy as np
from jax.experimental import pallas as pl
from jax.experimental.pallas import tpu as pltpu

EPS = 1e-5  # PyTorch BatchNorm1d default eps


def _round_up(n, m):
    return (n + m - 1) // m * m


def _cdiv(a, b):
    return (a + b - 1) // b


# --------------------------------------------------------------------------- #
# Kernel: 3 matmuls (BN + alpha pre-folded) + relu + gated residual mix.
# --------------------------------------------------------------------------- #
def alignnet_kernel(x_ref, w1_ref, b12_ref, w2_ref, w3_ref, b3_ref, beta_ref, out_ref):
    x = x_ref[...]                                    # (tb, Dp) io dtype (bf16 or f32)
    cdt = w1_ref.dtype                                # matmul compute dtype

    # ----- Linear 1 (BN1 folded in) + ReLU.  Dropout is identity in eval mode.
    h = jnp.dot(x.astype(cdt), w1_ref[...], preferred_element_type=jnp.float32)
    h = jnp.maximum(h + b12_ref[0:1, :], 0.0)

    # ----- Linear 2 (BN2 folded in) + ReLU.
    h = jnp.dot(h.astype(cdt), w2_ref[...], preferred_element_type=jnp.float32)
    h = jnp.maximum(h + b12_ref[1:2, :], 0.0)

    # ----- Linear 3 (alpha folded into W3/b3 at wrapper time).
    aligned = jnp.dot(h.astype(cdt), w3_ref[...], preferred_element_type=jnp.float32)
    aligned = aligned + b3_ref[...]

    # ----- Gated residual mix: out = alpha*aligned_raw + (1-alpha)*x
    #       = aligned + beta*x   (beta = 1 - sigmoid(mix), precomputed).
    beta = beta_ref[0, 0]
    out_ref[...] = (aligned + beta * x.astype(jnp.float32)).astype(out_ref.dtype)


# --------------------------------------------------------------------------- #
# Hardware / tiling helpers.
# --------------------------------------------------------------------------- #
def _hw_info():
    """(vmem_capacity_bytes, num_tensorcores) with conservative fallbacks."""
    vmem_cap = 64 << 20          # safe everywhere (v7x has 64 MiB/TC)
    num_tc = 1
    try:
        info = pltpu.get_tpu_info()
        vmem_cap = int(getattr(info, "vmem_capacity_bytes", vmem_cap))
    except Exception:
        pass
    try:
        kind = jax.devices()[0].device_kind.lower()
        if "v7" in kind or "7x" in kind:
            num_tc = 2
    except Exception:
        pass
    return vmem_cap, num_tc


def _choose_tile_b(B, Dp, Hp, w_item, io_item, budget, num_tc, row_align):
    """Pick the batch tile from the VMEM budget; balance tiles across TCs on v7x."""
    weight_bytes = (Dp * Hp + Hp * Hp + Hp * Dp) * w_item + (2 * Hp + Dp) * 4  # single-buffered
    per_row = (4 * Dp * io_item            # x tile + out tile, double-buffered
               + (2 * Hp + 2 * Dp) * 4)    # f32 intermediates (h, aligned, x_f32)
    avail = budget - weight_bytes - (4 << 20)
    max_rows = max(row_align, min(2048, (avail // per_row) // row_align * row_align))
    b_up = _round_up(B, row_align)

    if num_tc >= 2 and b_up > row_align:
        # v7x: even number of grid steps, real rows split evenly across both TCs.
        k = 1
        while _round_up(_cdiv(B, 2 * k), row_align) > max_rows:
            k += 1
        return _round_up(_cdiv(B, 2 * k), row_align)
    # 1-TC chips (v5e/v6e): the grid is a sequential loop -> one big tile.
    return min(max_rows, b_up)


# --------------------------------------------------------------------------- #
# Wrapper: BN/alpha folding, lane-dense padding, tiling, pallas_call.
# --------------------------------------------------------------------------- #
def _fold_bn(w, b, gamma, beta, mean, var):
    """Fold eval-mode BatchNorm1d into the preceding Linear (x @ W + b)."""
    scale = gamma * jax.lax.rsqrt(var + EPS)          # (1, H)
    return w * scale, (b - mean) * scale + beta       # (D, H), (1, H)


def alignnet_forward(x, params, *, tile_b=None, weight_dtype=jnp.bfloat16, io_dtype=None):
    B, D = x.shape
    H = params["w1"].shape[1]

    if io_dtype is None:
        io_dtype = weight_dtype
    w_item = jnp.dtype(weight_dtype).itemsize
    io_item = jnp.dtype(io_dtype).itemsize
    row_align = 16 if io_item < 4 else 8              # sublane-packing granularity for bf16 io

    vmem_cap, num_tc = _hw_info()
    budget = int(vmem_cap * 0.8)                      # ~102 MiB v5e/v6e, ~51 MiB v7x

    # ---- Fold BatchNorm into Linear 1 / Linear 2 (eval mode, running stats).
    w1f, b1f = _fold_bn(params["w1"], params["b1"], params["g1"], params["beta1"],
                        params["m1"], params["v1"])
    w2f, b2f = _fold_bn(params["w2"], params["b2"], params["g2"], params["beta2"],
                        params["m2"], params["v2"])
    # ---- Fold alpha = sigmoid(mix) into Linear 3; pass beta = 1 - alpha only.
    alpha = jax.nn.sigmoid(params["mix"])
    w3f = params["w3"] * alpha
    b3f = params["b3"] * alpha
    beta = (1.0 - alpha).reshape(1, 1).astype(jnp.float32)

    # ---- Pad feature dims to lane-dense multiples of 128.
    Dp = _round_up(D, 128)
    Hp = _round_up(H, 128)

    # ---- Large-H guard: resident weights must fit comfortably in VMEM.
    weight_bytes_full = (Dp * Hp + Hp * Hp + Hp * Dp) * w_item + (2 * Hp + Dp) * 4
    if weight_bytes_full > int(0.7 * budget):
        # TODO(synk): stream Hp chunks with a grid axis + f32 accumulator instead.
        return alignnet_reference(x, params)

    if tile_b is None:
        tile_b = _choose_tile_b(B, Dp, Hp, w_item, io_item, budget, num_tc, row_align)
    assert tile_b >= row_align and tile_b % row_align == 0, "bad tile_b"
    Bp = _round_up(B, tile_b)

    def pad2(a, rows, cols):
        return jnp.pad(a, ((0, rows - a.shape[0]), (0, cols - a.shape[1])))

    x_p = pad2(x, Bp, Dp).astype(io_dtype)                                 # streamed bf16/f32
    w1p = pad2(w1f, Dp, Hp).astype(weight_dtype)
    w2p = pad2(w2f, Hp, Hp).astype(weight_dtype)
    w3p = pad2(w3f, Hp, Dp).astype(weight_dtype)
    b12 = jnp.concatenate([pad2(b1f, 1, Hp), pad2(b2f, 1, Hp)], axis=0)    # (2, Hp) f32
    b3p = pad2(b3f, 1, Dp)                                                 # (1, Dp) f32

    # ---- VMEM budget: weights single-buffered (x2 slack covers a fallback to
    #      default double-buffering); x/out double-buffered; f32 intermediates.
    need = (2 * weight_bytes_full
            + 4 * tile_b * Dp * io_item
            + tile_b * (2 * Hp + 2 * Dp) * 4
            + (4 << 20))
    vmem_limit = int(min(budget, max(16 << 20, need)))

    grid = (Bp // tile_b,)
    flops = 2 * Bp * (Dp * Hp + Hp * Hp + Hp * Dp)
    bytes_accessed = int(2 * Bp * Dp * io_item + weight_bytes_full + 4)
    cost = pl.CostEstimate(flops=flops, transcendentals=0, bytes_accessed=bytes_accessed)

    def _call(single_buffer_weights):
        if single_buffer_weights:
            rep = lambda s: pl.BlockSpec(s, lambda i: (0, 0), pipeline_mode=pl.Buffered(1))
        else:
            rep = lambda s: pl.BlockSpec(s, lambda i: (0, 0))
        in_specs = [
            pl.BlockSpec((tile_b, Dp), lambda i: (i, 0)),          # x tile (streamed)
            rep((Dp, Hp)),                                         # W1 (BN folded)
            rep((2, Hp)),                                          # packed b1', b2'
            rep((Hp, Hp)),                                         # W2 (BN folded)
            rep((Hp, Dp)),                                         # W3 (alpha folded)
            rep((1, Dp)),                                          # b3 (alpha folded)
            pl.BlockSpec(memory_space=pltpu.MemorySpace.SMEM),     # beta scalar
        ]
        out_specs = pl.BlockSpec((tile_b, Dp), lambda i: (i, 0))
        return pl.pallas_call(
            alignnet_kernel,
            out_shape=jax.ShapeDtypeStruct((Bp, Dp), io_dtype),
            grid_spec=pltpu.PrefetchScalarGridSpec(
                num_scalar_prefetch=0,
                grid=grid,
                in_specs=in_specs,
                out_specs=out_specs,
            ),
            compiler_params=pltpu.CompilerParams(
                dimension_semantics=("parallel",),
                vmem_limit_bytes=vmem_limit,
            ),
            cost_estimate=cost,
        )(x_p, w1p, b12, w2p, w3p, b3p, beta)

    try:
        out_padded = _call(True)       # single-buffered constant weights
    except Exception:
        out_padded = _call(False)      # fallback: default (double-buffered) specs

    return out_padded[:B, :D].astype(jnp.float32)


# --------------------------------------------------------------------------- #
# Pure-JAX reference (eval-mode forward of the original module, f32).
# --------------------------------------------------------------------------- #
def alignnet_reference(x, params):
    def bn(h, g, be, m, v):
        return (h - m) * jax.lax.rsqrt(v + EPS) * g + be

    h = x @ params["w1"] + params["b1"]
    h = jnp.maximum(bn(h, params["g1"], params["beta1"], params["m1"], params["v1"]), 0.0)
    h = h @ params["w2"] + params["b2"]
    h = jnp.maximum(bn(h, params["g2"], params["beta2"], params["m2"], params["v2"]), 0.0)
    aligned = h @ params["w3"] + params["b3"]
    alpha = jax.nn.sigmoid(params["mix"][0, 0])
    return alpha * aligned + (1.0 - alpha) * x


def init_params(key, input_dim, hidden_dim):
    ks = jax.random.split(key, 12)
    f32 = jnp.float32
    scale1 = 1.0 / np.sqrt(input_dim)
    scale2 = 1.0 / np.sqrt(hidden_dim)
    return {
        # Linear layers (stored as (in, out), i.e. PyTorch W transposed at init).
        "w1": jax.random.uniform(ks[0], (input_dim, hidden_dim), f32, -scale1, scale1),
        "b1": jax.random.uniform(ks[1], (1, hidden_dim), f32, -scale1, scale1),
        "w2": jax.random.uniform(ks[2], (hidden_dim, hidden_dim), f32, -scale2, scale2),
        "b2": jax.random.uniform(ks[3], (1, hidden_dim), f32, -scale2, scale2),
        "w3": jax.random.uniform(ks[4], (hidden_dim, input_dim), f32, -scale2, scale2),
        "b3": jax.random.uniform(ks[5], (1, input_dim), f32, -scale2, scale2),
        # BatchNorm1d #1 (gamma, beta, running_mean, running_var)
        "g1": 1.0 + 0.1 * jax.random.normal(ks[6], (1, hidden_dim), f32),
        "beta1": 0.1 * jax.random.normal(ks[7], (1, hidden_dim), f32),
        "m1": 0.1 * jax.random.normal(ks[8], (1, hidden_dim), f32),
        "v1": 1.0 + 0.1 * jnp.abs(jax.random.normal(ks[9], (1, hidden_dim), f32)),
        # BatchNorm1d #2
        "g2": 1.0 + 0.1 * jax.random.normal(ks[10], (1, hidden_dim), f32),
        "beta2": 0.1 * jax.random.normal(ks[11], (1, hidden_dim), f32),
        "m2": jnp.zeros((1, hidden_dim), f32),
        "v2": jnp.ones((1, hidden_dim), f32),
        # mix_param = 0.5 (as in nn.Parameter(torch.tensor(0.5)))
        "mix": jnp.full((1, 1), 0.5, f32),
    }


if __name__ == "__main__":
    input_dim = 16
    hidden_dim = 64     # module default hidden_dim=64
    batch = 16

    key = jax.random.PRNGKey(0)
    k_x, k_p = jax.random.split(key)
    x = jax.random.normal(k_x, (batch, input_dim), jnp.float32)
    params = init_params(k_p, input_dim, hidden_dim)

    ref = np.asarray(alignnet_reference(x, params))

    # Exact-semantics check (f32 weights, f32 io): tight tolerance.
    out_f32 = jax.block_until_ready(
        alignnet_forward(x, params, weight_dtype=jnp.float32, io_dtype=jnp.float32))
    np.testing.assert_allclose(np.asarray(out_f32), ref, rtol=1e-5, atol=1e-5)

    # Fast path (bf16 weights + bf16 x/out streams, f32 accumulation): bf16-level tolerance.
    out_bf16 = jax.block_until_ready(
        alignnet_forward(x, params, weight_dtype=jnp.bfloat16, io_dtype=jnp.bfloat16))
    np.testing.assert_allclose(np.asarray(out_bf16.astype(jnp.float32)), ref, rtol=2e-2, atol=2e-2)

    print("KERNEL_OK")
</pallas_src>

<mosaic_0001>
module attributes {stable_mosaic.version = 11 : i64} {
  func.func @alignnet_kernel(%arg0: i32, %arg1: memref<16x128xf32, #tpu.memory_space<vmem>>, %arg2: memref<128x128xf32, #tpu.memory_space<vmem>>, %arg3: memref<2x128xf32, #tpu.memory_space<vmem>>, %arg4: memref<128x128xf32, #tpu.memory_space<vmem>>, %arg5: memref<128x128xf32, #tpu.memory_space<vmem>>, %arg6: memref<1x128xf32, #tpu.memory_space<vmem>>, %arg7: memref<1x1xf32, #tpu.memory_space<smem>>, %arg8: memref<16x128xf32, #tpu.memory_space<vmem>>) attributes {dimension_semantics = [#tpu.dimension_semantics<parallel>], iteration_bounds = array<i64: 1>, scalar_prefetch = 0 : i64, scratch_operands = 0 : i64, tpu.core_type = #tpu.core_type<tc>, window_params = [{transform_indices = @transform_0, window_bounds = array<i64: 16, 128>}, {pipeline_mode = #tpu.pipeline_mode<synchronous>, transform_indices = @transform_1, window_bounds = array<i64: 128, 128>}, {pipeline_mode = #tpu.pipeline_mode<synchronous>, transform_indices = @transform_2, window_bounds = array<i64: 2, 128>}, {pipeline_mode = #tpu.pipeline_mode<synchronous>, transform_indices = @transform_3, window_bounds = array<i64: 128, 128>}, {pipeline_mode = #tpu.pipeline_mode<synchronous>, transform_indices = @transform_4, window_bounds = array<i64: 128, 128>}, {pipeline_mode = #tpu.pipeline_mode<synchronous>, transform_indices = @transform_5, window_bounds = array<i64: 1, 128>}, {transform_indices = @transform_6, window_bounds = array<i64: 1, 1>}, {transform_indices = @transform_7, window_bounds = array<i64: 16, 128>}]} {
    %c0 = arith.constant 0 : index
    %c0_0 = arith.constant 0 : index
    %0 = vector.load %arg1[%c0, %c0_0] : memref<16x128xf32, #tpu.memory_space<vmem>>, vector<16x128xf32>
    %c0_1 = arith.constant 0 : index
    %c0_2 = arith.constant 0 : index
    %1 = vector.load %arg2[%c0_1, %c0_2] : memref<128x128xf32, #tpu.memory_space<vmem>>, vector<128x128xf32>
    %cst = arith.constant dense<0.000000e+00> : vector<16x128xf32>
    %2 = tpu.matmul %0, %1, %cst {dimension_numbers = #tpu.dot_dimension_numbers<[1], [0], [0], [1], [0, 0, 1, 1], [], []>} : vector<16x128xf32>, vector<128x128xf32>, vector<16x128xf32> -> vector<16x128xf32>
    %c0_3 = arith.constant 0 : index
    %c0_4 = arith.constant 0 : index
    %3 = vector.load %arg3[%c0_3, %c0_4] : memref<2x128xf32, #tpu.memory_space<vmem>>, vector<1x128xf32>
    %4 = vector.broadcast %3 : vector<1x128xf32> to vector<16x128xf32>
    %5 = arith.addf %2, %4 : vector<16x128xf32>
    %cst_5 = arith.constant 0.000000e+00 : f32
    %6 = vector.broadcast %cst_5 : f32 to vector<16x128xf32>
    %7 = arith.maximumf %5, %6 : vector<16x128xf32>
    %c0_6 = arith.constant 0 : index
    %c0_7 = arith.constant 0 : index
    %8 = vector.load %arg4[%c0_6, %c0_7] : memref<128x128xf32, #tpu.memory_space<vmem>>, vector<128x128xf32>
    %cst_8 = arith.constant dense<0.000000e+00> : vector<16x128xf32>
    %9 = tpu.matmul %7, %8, %cst_8 {dimension_numbers = #tpu.dot_dimension_numbers<[1], [0], [0], [1], [0, 0, 1, 1], [], []>} : vector<16x128xf32>, vector<128x128xf32>, vector<16x128xf32> -> vector<16x128xf32>
    %c1 = arith.constant 1 : index
    %c0_9 = arith.constant 0 : index
    %10 = vector.load %arg3[%c1, %c0_9] : memref<2x128xf32, #tpu.memory_space<vmem>>, vector<1x128xf32>
    %11 = vector.broadcast %10 : vector<1x128xf32> to vector<16x128xf32>
    %12 = arith.addf %9, %11 : vector<16x128xf32>
    %cst_10 = arith.constant 0.000000e+00 : f32
    %13 = vector.broadcast %cst_10 : f32 to vector<16x128xf32>
    %14 = arith.maximumf %12, %13 : vector<16x128xf32>
    %c0_11 = arith.constant 0 : index
    %c0_12 = arith.constant 0 : index
    %15 = vector.load %arg5[%c0_11, %c0_12] : memref<128x128xf32, #tpu.memory_space<vmem>>, vector<128x128xf32>
    %cst_13 = arith.constant dense<0.000000e+00> : vector<16x128xf32>
    %16 = tpu.matmul %14, %15, %cst_13 {dimension_numbers = #tpu.dot_dimension_numbers<[1], [0], [0], [1], [0, 0, 1, 1], [], []>} : vector<16x128xf32>, vector<128x128xf32>, vector<16x128xf32> -> vector<16x128xf32>
    %c0_14 = arith.constant 0 : index
    %c0_15 = arith.constant 0 : index
    %17 = vector.load %arg6[%c0_14, %c0_15] : memref<1x128xf32, #tpu.memory_space<vmem>>, vector<1x128xf32>
    %18 = vector.broadcast %17 : vector<1x128xf32> to vector<16x128xf32>
    %19 = arith.addf %16, %18 : vector<16x128xf32>
    %c0_16 = arith.constant 0 : index
    %c0_17 = arith.constant 0 : index
    %20 = memref.load %arg7[%c0_16, %c0_17] : memref<1x1xf32, #tpu.memory_space<smem>>
    %21 = vector.broadcast %20 : f32 to vector<16x128xf32>
    %22 = arith.mulf %21, %0 : vector<16x128xf32>
    %23 = arith.addf %19, %22 : vector<16x128xf32>
    %c0_18 = arith.constant 0 : index
    %c0_19 = arith.constant 0 : index
    %24 = vector.load %arg8[%c0_18, %c0_19] : memref<16x128xf32, #tpu.memory_space<vmem>>, vector<16x128xf32>
    tpu.vector_store %arg8[%c0_18, %c0_19], %23 {strides = array<i32>} : memref<16x128xf32, #tpu.memory_space<vmem>>, vector<16x128xf32>,
    return
  }
  func.func @transform_0(%arg0: i32) -> (i32, i32) {
    %c0_i32 = arith.constant 0 : i32
    %c0_i32_0 = arith.constant 0 : i32
    return %arg0, %c0_i32 : i32, i32
  }
  func.func @transform_1(%arg0: i32) -> (i32, i32) {
    %c0_i32 = arith.constant 0 : i32
    %c0_i32_0 = arith.constant 0 : i32
    %c0_i32_1 = arith.constant 0 : i32
    return %c0_i32, %c0_i32_0 : i32, i32
  }
  func.func @transform_2(%arg0: i32) -> (i32, i32) {
    %c0_i32 = arith.constant 0 : i32
    %c0_i32_0 = arith.constant 0 : i32
    %c0_i32_1 = arith.constant 0 : i32
    return %c0_i32, %c0_i32_0 : i32, i32
  }
  func.func @transform_3(%arg0: i32) -> (i32, i32) {
    %c0_i32 = arith.constant 0 : i32
    %c0_i32_0 = arith.constant 0 : i32
    %c0_i32_1 = arith.constant 0 : i32
    return %c0_i32, %c0_i32_0 : i32, i32
  }
  func.func @transform_4(%arg0: i32) -> (i32, i32) {
    %c0_i32 = arith.constant 0 : i32
    %c0_i32_0 = arith.constant 0 : i32
    %c0_i32_1 = arith.constant 0 : i32
    return %c0_i32, %c0_i32_0 : i32, i32
  }
  func.func @transform_5(%arg0: i32) -> (i32, i32) {
    %c0_i32 = arith.constant 0 : i32
    %c0_i32_0 = arith.constant 0 : i32
    %c0_i32_1 = arith.constant 0 : i32
    return %c0_i32, %c0_i32_0 : i32, i32
  }
  func.func @transform_6(%arg0: i32) -> (i32, i32) {
    %c0_i32 = arith.constant 0 : i32
    %c0_i32_0 = arith.constant 0 : i32
    %c0_i32_1 = arith.constant 0 : i32
    return %c0_i32, %c0_i32_0 : i32, i32
  }
  func.func @transform_7(%arg0: i32) -> (i32, i32) {
    %c0_i32 = arith.constant 0 : i32
    %c0_i32_0 = arith.constant 0 : i32
    return %arg0, %c0_i32 : i32, i32
  }
}

module attributes {stable_mosaic.version = 11 : i64} {
  func.func @alignnet_kernel(%arg0: i32, %arg1: memref<16x128xf32, #tpu.memory_space<vmem>>, %arg2: memref<128x128xf32, #tpu.memory_space<vmem>>, %arg3: memref<2x128xf32, #tpu.memory_space<vmem>>, %arg4: memref<128x128xf32, #tpu.memory_space<vmem>>, %arg5: memref<128x128xf32, #tpu.memory_space<vmem>>, %arg6: memref<1x128xf32, #tpu.memory_space<vmem>>, %arg7: memref<1x1xf32, #tpu.memory_space<smem>>, %arg8: memref<16x128xf32, #tpu.memory_space<vmem>>) attributes {dimension_semantics = [#tpu.dimension_semantics<parallel>], iteration_bounds = array<i64: 1>, scalar_prefetch = 0 : i64, scratch_operands = 0 : i64, tpu.core_type = #tpu.core_type<tc>, window_params = [{transform_indices = @transform_0, window_bounds = array<i64: 16, 128>}, {pipeline_mode = #tpu.pipeline_mode<synchronous>, transform_indices = @transform_1, window_bounds = array<i64: 128, 128>}, {pipeline_mode = #tpu.pipeline_mode<synchronous>, transform_indices = @transform_2, window_bounds = array<i64: 2, 128>}, {pipeline_mode = #tpu.pipeline_mode<synchronous>, transform_indices = @transform_3, window_bounds = array<i64: 128, 128>}, {pipeline_mode = #tpu.pipeline_mode<synchronous>, transform_indices = @transform_4, window_bounds = array<i64: 128, 128>}, {pipeline_mode = #tpu.pipeline_mode<synchronous>, transform_indices = @transform_5, window_bounds = array<i64: 1, 128>}, {transform_indices = @transform_6, window_bounds = array<i64: 1, 1>}, {transform_indices = @transform_7, window_bounds = array<i64: 16, 128>}]} {
    %c0 = arith.constant 0 : index
    %c0_0 = arith.constant 0 : index
    %0 = vector.load %arg1[%c0, %c0_0] : memref<16x128xf32, #tpu.memory_space<vmem>>, vector<16x128xf32>
    %c0_1 = arith.constant 0 : index
    %c0_2 = arith.constant 0 : index
    %1 = vector.load %arg2[%c0_1, %c0_2] : memref<128x128xf32, #tpu.memory_space<vmem>>, vector<128x128xf32>
    %cst = arith.constant dense<0.000000e+00> : vector<16x128xf32>
    %2 = tpu.matmul %0, %1, %cst {dimension_numbers = #tpu.dot_dimension_numbers<[1], [0], [0], [1], [0, 0, 1, 1], [], []>} : vector<16x128xf32>, vector<128x128xf32>, vector<16x128xf32> -> vector<16x128xf32>
    %c0_3 = arith.constant 0 : index
    %c0_4 = arith.constant 0 : index
    %3 = vector.load %arg3[%c0_3, %c0_4] : memref<2x128xf32, #tpu.memory_space<vmem>>, vector<1x128xf32>
    %4 = vector.broadcast %3 : vector<1x128xf32> to vector<16x128xf32>
    %5 = arith.addf %2, %4 : vector<16x128xf32>
    %cst_5 = arith.constant 0.000000e+00 : f32
    %6 = vector.broadcast %cst_5 : f32 to vector<16x128xf32>
    %7 = arith.maximumf %5, %6 : vector<16x128xf32>
    %c0_6 = arith.constant 0 : index
    %c0_7 = arith.constant 0 : index
    %8 = vector.load %arg4[%c0_6, %c0_7] : memref<128x128xf32, #tpu.memory_space<vmem>>, vector<128x128xf32>
    %cst_8 = arith.constant dense<0.000000e+00> : vector<16x128xf32>
    %9 = tpu.matmul %7, %8, %cst_8 {dimension_numbers = #tpu.dot_dimension_numbers<[1], [0], [0], [1], [0, 0, 1, 1], [], []>} : vector<16x128xf32>, vector<128x128xf32>, vector<16x128xf32> -> vector<16x128xf32>
    %c1 = arith.constant 1 : index
    %c0_9 = arith.constant 0 : index
    %10 = vector.load %arg3[%c1, %c0_9] : memref<2x128xf32, #tpu.memory_space<vmem>>, vector<1x128xf32>
    %11 = vector.broadcast %10 : vector<1x128xf32> to vector<16x128xf32>
    %12 = arith.addf %9, %11 : vector<16x128xf32>
    %cst_10 = arith.constant 0.000000e+00 : f32
    %13 = vector.broadcast %cst_10 : f32 to vector<16x128xf32>
    %14 = arith.maximumf %12, %13 : vector<16x128xf32>
    %c0_11 = arith.constant 0 : index
    %c0_12 = arith.constant 0 : index
    %15 = vector.load %arg5[%c0_11, %c0_12] : memref<128x128xf32, #tpu.memory_space<vmem>>, vector<128x128xf32>
    %cst_13 = arith.constant dense<0.000000e+00> : vector<16x128xf32>
    %16 = tpu.matmul %14, %15, %cst_13 {dimension_numbers = #tpu.dot_dimension_numbers<[1], [0], [0], [1], [0, 0, 1, 1], [], []>} : vector<16x128xf32>, vector<128x128xf32>, vector<16x128xf32> -> vector<16x128xf32>
    %c0_14 = arith.constant 0 : index
    %c0_15 = arith.constant 0 : index
    %17 = vector.load %arg6[%c0_14, %c0_15] : memref<1x128xf32, #tpu.memory_space<vmem>>, vector<1x128xf32>
    %18 = vector.broadcast %17 : vector<1x128xf32> to vector<16x128xf32>
    %19 = arith.addf %16, %18 : vector<16x128xf32>
    %c0_16 = arith.constant 0 : index
    %c0_17 = arith.constant 0 : index
    %20 = memref.load %arg7[%c0_16, %c0_17] : memref<1x1xf32, #tpu.memory_space<smem>>
    %21 = vector.broadcast %20 : f32 to vector<16x128xf32>
    %22 = arith.mulf %21, %0 : vector<16x128xf32>
    %23 = arith.addf %19, %22 : vector<16x128xf32>
    %c0_18 = arith.constant 0 : index
    %c0_19 = arith.constant 0 : index
    %24 = vector.load %arg8[%c0_18, %c0_19] : memref<16x128xf32, #tpu.memory_space<vmem>>, vector<16x128xf32>
    tpu.vector_store %arg8[%c0_18, %c0_19], %23 {strides = array<i32>} : memref<16x128xf32, #tpu.memory_space<vmem>>, vector<16x128xf32>,
    return
  }
  func.func @transform_0(%arg0: i32) -> (i32, i32) {
    %c0_i32 = arith.constant 0 : i32
    %c0_i32_0 = arith.constant 0 : i32
    return %arg0, %c0_i32 : i32, i32
  }
  func.func @transform_1(%arg0: i32) -> (i32, i32) {
    %c0_i32 = arith.constant 0 : i32
    %c0_i32_0 = arith.constant 0 : i32
    %c0_i32_1 = arith.constant 0 : i32
    return %c0_i32, %c0_i32_0 : i32, i32
  }
  func.func @transform_2(%arg0: i32) -> (i32, i32) {
    %c0_i32 = arith.constant 0 : i32
    %c0_i32_0 = arith.constant 0 : i32
    %c0_i32_1 = arith.constant 0 : i32
    return %c0_i32, %c0_i32_0 : i32, i32
  }
  func.func @transform_3(%arg0: i32) -> (i32, i32) {
    %c0_i32 = arith.constant 0 : i32
    %c0_i32_0 = arith.constant 0 : i32
    %c0_i32_1 = arith.constant 0 : i32
    return %c0_i32, %c0_i32_0 : i32, i32
  }
  func.func @transform_4(%arg0: i32) -> (i32, i32) {
    %c0_i32 = arith.constant 0 : i32
    %c0_i32_0 = arith.constant 0 : i32
    %c0_i32_1 = arith.constant 0 : i32
    return %c0_i32, %c0_i32_0 : i32, i32
  }
  func.func @transform_5(%arg0: i32) -> (i32, i32) {
    %c0_i32 = arith.constant 0 : i32
    %c0_i32_0 = arith.constant 0 : i32
    %c0_i32_1 = arith.constant 0 : i32
    return %c0_i32, %c0_i32_0 : i32, i32
  }
  func.func @transform_6(%arg0: i32) -> (i32, i32) {
    %c0_i32 = arith.constant 0 : i32
    %c0_i32_0 = arith.constant 0 : i32
    %c0_i32_1 = arith.constant 0 : i32
    return %c0_i32, %c0_i32_0 : i32, i32
  }
  func.func @transform_7(%arg0: i32) -> (i32, i32) {
    %c0_i32 = arith.constant 0 : i32
    %c0_i32_0 = arith.constant 0 : i32
    return %arg0, %c0_i32 : i32, i32
  }
}

</mosaic_0001>

<llo_original>
// kernel: tpu_custom_call.1
$region0: #{tpu_custom_call.1}
  #allocation0 [shape = 'u32[]', space=smem, size = 0x4, offset = 0x4, fixed_abs, tag = 'smem constant byte address 0x4 - core index']
  #allocation1 [shape = 'u32[144,128]{1,0:T(1,128)}', space=vmem, size = 0x12000, scoped, tag = 'internal scratch']
  #allocation2 [shape = 'f32[1,1]{1,0:T(1,128)S(6)}', space=smem, size = 0x200, scoped, tag = 'scoped memory for tpu_custom_call.1']
  %s0 = inlined_call_operand.hbm [shape: f32[16,128], index: 0, kind: input, shape index: {}]
  %s1 = inlined_call_operand.hbm [shape: f32[128,128], index: 1, kind: input, shape index: {}]
  %s2 = inlined_call_operand.vmem [shape: f32[2,128], index: 2, kind: input, shape index: {}]
  %s3 = inlined_call_operand.hbm [shape: f32[128,128], index: 3, kind: input, shape index: {}]
  %s4 = inlined_call_operand.hbm [shape: f32[128,128], index: 4, kind: input, shape index: {}]
  %s5 = inlined_call_operand.vmem [shape: f32[1,128], index: 5, kind: input, shape index: {}]
  %s6 = inlined_call_operand.<no memory space> [shape: f32[1,1], index: 6, kind: input, shape index: {}]
  %s7 = inlined_call_operand.hbm [shape: f32[16,128], index: 7, kind: output, shape index: {}]
  %s8 = sld [smem:[#allocation0]]
  $region54: #{tpu_custom_call.1} parent=0
    _
  %s10 = ssub.s32 1, %s8
  %s11 = scalar_select 0, %s10, %s8
  %12 = sst [smem:[#allocation2]] %s6
  $region1: #{tpu_custom_call.1} parent=0
    #allocation3 [shape = 'u8[8192]{0}', space=vmem, size = 0x2000, scoped, tag = 'input window, operand 0, single buffered']
    #allocation4 [shape = 's32[1]{0}', space=sflag, size = 0x4, scoped, tag = 'scoped memory for tpu_custom_call.1']
    #allocation5 [shape = 's32[1]{0}', space=sflag, size = 0x4, scoped, tag = 'scoped memory for tpu_custom_call.1']
    #allocation6 [shape = 'u8[65536]{0}', space=vmem, size = 0x10000, scoped, tag = 'input window, operand 1, single buffered']
    #allocation7 [shape = 's32[1]{0}', space=sflag, size = 0x4, scoped, tag = 'scoped memory for tpu_custom_call.1']
    #allocation8 [shape = 'u8[65536]{0}', space=vmem, size = 0x10000, scoped, tag = 'input window, operand 3, single buffered']
    #allocation9 [shape = 'u8[65536]{0}', space=vmem, size = 0x10000, scoped, tag = 'input window, operand 4, single buffered']
    #allocation10 [shape = 's32[1]{0}', space=sflag, size = 0x4, scoped, tag = 'scoped memory for tpu_custom_call.1']
    #allocation11 [shape = 'u8[8192]{0}', space=vmem, size = 0x2000, scoped, tag = 'output window, operand 0, single buffered']
    %13 = vsyncpa [#allocation4], 0
    %14 = vsyncpa [#allocation7], 0
    %15 = vsyncpa [#allocation10], 0
    %16 = vsyncpa [#allocation5], 0
    // Predicated region
    $region2: #{tpu_custom_call.1} parent=1 // pred_check
      _
    $region3: #{tpu_custom_call.1} parent=1 // pred_check_branch
      %18 = sbr.rel (0) target = $region5
    $region4: #{tpu_custom_call.1} parent=1 // pred_region
      %s20 = ssub.s32 256, 256
      %21 = vsyncadd [#allocation4], %s20
      %s22 = sshll.u32 [#allocation3], 4
      %s23 = int_to_ptr.vmem [resolvable:$true] %s22
      %28 = dma.hbm_to_vmem [thread:$0]  %s0, 256, %s23, [#allocation4], 128, 128, 8
    $region5: #{tpu_custom_call.1} parent=1 // pred_fallthru
      _
    // Predicated region
    $region6: #{tpu_custom_call.1} parent=1 // pred_check
      _
    $region7: #{tpu_custom_call.1} parent=1 // pred_check_branch
      %30 = sbr.rel (0) target = $region9
    $region8: #{tpu_custom_call.1} parent=1 // pred_region
      %s32 = ssub.s32 2048, 2048
      %33 = vsyncadd [#allocation7], %s32
      %s34 = sshll.u32 [#allocation6], 4
      %s35 = int_to_ptr.vmem [resolvable:$true] %s34
      %40 = dma.hbm_to_vmem [thread:$0]  %s1, 2048, %s35, [#allocation7], 128, 128, 8
    $region9: #{tpu_custom_call.1} parent=1 // pred_fallthru
      _
    // Predicated region
    $region10: #{tpu_custom_call.1} parent=1 // pred_check
      _
    $region11: #{tpu_custom_call.1} parent=1 // pred_check_branch
      %42 = sbr.rel (0) target = $region13
    $region12: #{tpu_custom_call.1} parent=1 // pred_region
      _
    $region13: #{tpu_custom_call.1} parent=1 // pred_fallthru
      _
    // Predicated region
    $region14: #{tpu_custom_call.1} parent=1 // pred_check
      _
    $region15: #{tpu_custom_call.1} parent=1 // pred_check_branch
      %44 = sbr.rel (0) target = $region17
    $region16: #{tpu_custom_call.1} parent=1 // pred_region
      %s46 = ssub.s32 2048, 2048
      %47 = vsyncadd [#allocation7], %s46
      %s48 = sshll.u32 [#allocation8], 4
      %s49 = int_to_ptr.vmem [resolvable:$true] %s48
      %54 = dma.hbm_to_vmem [thread:$0]  %s3, 2048, %s49, [#allocation7], 128, 128, 8
    $region17: #{tpu_custom_call.1} parent=1 // pred_fallthru
      _
    // Predicated region
    $region18: #{tpu_custom_call.1} parent=1 // pred_check
      _
    $region19: #{tpu_custom_call.1} parent=1 // pred_check_branch
      %56 = sbr.rel (0) target = $region21
    $region20: #{tpu_custom_call.1} parent=1 // pred_region
      %s58 = ssub.s32 2048, 2048
      %59 = vsyncadd [#allocation10], %s58
      %s60 = sshll.u32 [#allocation9], 4
      %s61 = int_to_ptr.vmem [resolvable:$true] %s60
      %66 = dma.hbm_to_vmem [thread:$0]  %s4, 2048, %s61, [#allocation10], 128, 128, 8
    $region21: #{tpu_custom_call.1} parent=1 // pred_fallthru
      _
    // Predicated region
    $region22: #{tpu_custom_call.1} parent=1 // pred_check
      _
    $region23: #{tpu_custom_call.1} parent=1 // pred_check_branch
      %68 = sbr.rel (0) target = $region25
    $region24: #{tpu_custom_call.1} parent=1 // pred_region
      _
    $region25: #{tpu_custom_call.1} parent=1 // pred_fallthru
      _
    // Predicated region
    $region26: #{tpu_custom_call.1} parent=1 // pred_check
      _
    $region27: #{tpu_custom_call.1} parent=1 // pred_check_branch
      %70 = sbr.rel (0) target = $region29
    $region28: #{tpu_custom_call.1} parent=1 // pred_region
      _
    $region29: #{tpu_custom_call.1} parent=1 // pred_fallthru
      _
    // Predicated region
    $region30: #{tpu_custom_call.1} parent=1 // pred_check
      _
    $region31: #{tpu_custom_call.1} parent=1 // pred_check_branch
      %72 = sbr.rel (0) target = $region33
    $region32: #{tpu_custom_call.1} parent=1 // pred_region
      %73 = dma.done [#allocation4], 256
    $region33: #{tpu_custom_call.1} parent=1 // pred_fallthru
      _
    // Predicated region
    $region34: #{tpu_custom_call.1} parent=1 // pred_check
      _
    $region35: #{tpu_custom_call.1} parent=1 // pred_check_branch
      %75 = sbr.rel (0) target = $region37
    $region36: #{tpu_custom_call.1} parent=1 // pred_region
      %76 = dma.done [#allocation7], 2048
    $region37: #{tpu_custom_call.1} parent=1 // pred_fallthru
      _
    // Predicated region
    $region38: #{tpu_custom_call.1} parent=1 // pred_check
      _
    $region39: #{tpu_custom_call.1} parent=1 // pred_check_branch
      %78 = sbr.rel (0) target = $region41
    $region40: #{tpu_custom_call.1} parent=1 // pred_region
      %79 = dma.done [#allocation7], 2048
    $region41: #{tpu_custom_call.1} parent=1 // pred_fallthru
      _
    // Predicated region
    $region42: #{tpu_custom_call.1} parent=1 // pred_check
      _
    $region43: #{tpu_custom_call.1} parent=1 // pred_check_branch
      %81 = sbr.rel (0) target = $region45
    $region44: #{tpu_custom_call.1} parent=1 // pred_region
      %82 = dma.done [#allocation10], 2048
    $region45: #{tpu_custom_call.1} parent=1 // pred_fallthru
      _
    %v83 = vld [vmem:[#allocation3] sm:$0xff]
    %v84 = vld [vmem:[#allocation3 + $0x8] sm:$0xff]
    %v85 = vld [vmem:[#allocation6] sm:$0xff]
    %v86 = vld [vmem:[#allocation6 + $0x8] sm:$0xff]
    %v87 = vld [vmem:[#allocation6 + $0x10] sm:$0xff]
    %v88 = vld [vmem:[#allocation6 + $0x18] sm:$0xff]
    %v89 = vld [vmem:[#allocation6 + $0x20] sm:$0xff]
    %v90 = vld [vmem:[#allocation6 + $0x28] sm:$0xff]
    %v91 = vld [vmem:[#allocation6 + $0x30] sm:$0xff]
    %v92 = vld [vmem:[#allocation6 + $0x38] sm:$0xff]
    %v93 = vld [vmem:[#allocation6 + $0x40] sm:$0xff]
    %v94 = vld [vmem:[#allocation6 + $0x48] sm:$0xff]
    %v95 = vld [vmem:[#allocation6 + $0x50] sm:$0xff]
    %v96 = vld [vmem:[#allocation6 + $0x58] sm:$0xff]
    %v97 = vld [vmem:[#allocation6 + $0x60] sm:$0xff]
    %v98 = vld [vmem:[#allocation6 + $0x68] sm:$0xff]
    %v99 = vld [vmem:[#allocation6 + $0x70] sm:$0xff]
    %v100 = vld [vmem:[#allocation6 + $0x78] sm:$0xff]
    %v101 = vld [vmem:[%s2] sm:$0x1]
    %v102 = vlaneseq
    %v103 = vshrl.u32 %v102, 7
    %v104 = vsub.s32 0, %v103
    %v105 = vrot.slane %v101, %v104
    %106 = vmatprep.subr.mxu0 0.0
    %107 = vmatpush1.msra.mxu0 %v85
    %108 = vmatprep.subr.mxu0 0.0
    %109 = vmatpush1.msra.mxu0 %v86
    %110 = vmatprep.subr.mxu0 0.0
    %111 = vmatpush1.msra.mxu0 %v87
    %112 = vmatprep.subr.mxu0 0.0
    %113 = vmatpush1.msra.mxu0 %v88
    %114 = vmatprep.subr.mxu0 0.0
    %115 = vmatpush1.msra.mxu0 %v89
    %116 = vmatprep.subr.mxu0 0.0
    %117 = vmatpush1.msra.mxu0 %v90
    %118 = vmatprep.subr.mxu0 0.0
    %119 = vmatpush1.msra.mxu0 %v91
    %120 = vmatprep.subr.mxu0 0.0
    %121 = vmatpush1.msra.mxu0 %v92
    %122 = vmatprep.subr.mxu0 0.0
    %123 = vmatpush1.msra.mxu0 %v93
    %124 = vmatprep.subr.mxu0 0.0
    %125 = vmatpush1.msra.mxu0 %v94
    %126 = vmatprep.subr.mxu0 0.0
    %127 = vmatpush1.msra.mxu0 %v95
    %128 = vmatprep.subr.mxu0 0.0
    %129 = vmatpush1.msra.mxu0 %v96
    %130 = vmatprep.subr.mxu0 0.0
    %131 = vmatpush1.msra.mxu0 %v97
    %132 = vmatprep.subr.mxu0 0.0
    %133 = vmatpush1.msra.mxu0 %v98
    %134 = vmatprep.subr.mxu0 0.0
    %135 = vmatpush1.msra.mxu0 %v99
    %136 = vmatprep.subr.mxu0 0.0
    %137 = vmatpush1.msra.mxu0 %v100
    %138 = vmatprep.subr.mxu0 0.0
    %139 = vmatpush1.msra.mxu0 0.0
    %140 = vmatprep.subr.mxu0 0.0
    %141 = vmatpush1.msra.mxu0 0.0
    %142 = vmatprep.subr.mxu0 0.0
    %143 = vmatpush1.msra.mxu0 0.0
    %144 = vmatprep.subr.mxu0 0.0
    %145 = vmatpush1.msra.mxu0 0.0
    %146 = vmatprep.subr.mxu0 0.0
    %147 = vmatpush1.msra.mxu0 0.0
    %148 = vmatprep.subr.mxu0 0.0
    %149 = vmatpush1.msra.mxu0 0.0
    %150 = vmatprep.subr.mxu0 0.0
    %151 = vmatpush1.msra.mxu0 0.0
    %152 = vmatprep.subr.mxu0 0.0
    %153 = vmatpush1.msra.mxu0 0.0
    %154 = vmatprep.subr.mxu0 0.0
    %155 = vmatpush1.msra.mxu0 0.0
    %156 = vmatprep.subr.mxu0 0.0
    %157 = vmatpush1.msra.mxu0 0.0
    %158 = vmatprep.subr.mxu0 0.0
    %159 = vmatpush1.msra.mxu0 0.0
    %160 = vmatprep.subr.mxu0 0.0
    %161 = vmatpush1.msra.mxu0 0.0
    %162 = vmatprep.subr.mxu0 0.0
    %163 = vmatpush1.msra.mxu0 0.0
    %164 = vmatprep.subr.mxu0 0.0
    %165 = vmatpush1.msra.mxu0 0.0
    %166 = vmatprep.subr.mxu0 0.0
    %167 = vmatpush1.msra.mxu0 0.0
    %168 = vmatprep.subr.mxu0 0.0
    %169 = vmatpush1.msra.mxu0 0.0
    %170 = vmatprep.mubr.f32.mxu0 0.0
    %171 = vmatmul.mubr.f32.gmra.mrb[0].mxu0 %v83
    %v172 = vpop.f32.mrb[0].mxu0
    %v173 = vadd.f32 %v105, %v172
    %v174 = vpop.f32.mrb[0].mxu0
    %175 = vmatprep.mubr.f32.mxu0 0.0
    %176 = vmatmul.mubr.f32.gmra.mrb[0].mxu0 %v84
    %v177 = vpop.f32.mrb[0].mxu0
    %v178 = vadd.f32 %v105, %v177
    %v179 = vpop.f32.mrb[0].mxu0
    %180 = vdwg.mxu0
    %v181 = vmax.f32 %v173, 0.0
    %v182 = vmax.f32 %v178, 0.0
    %v183 = vld [vmem:[#allocation8] sm:$0xff]
    %v184 = vld [vmem:[#allocation8 + $0x8] sm:$0xff]
    %v185 = vld [vmem:[#allocation8 + $0x10] sm:$0xff]
    %v186 = vld [vmem:[#allocation8 + $0x18] sm:$0xff]
    %v187 = vld [vmem:[#allocation8 + $0x20] sm:$0xff]
    %v188 = vld [vmem:[#allocation8 + $0x28] sm:$0xff]
    %v189 = vld [vmem:[#allocation8 + $0x30] sm:$0xff]
    %v190 = vld [vmem:[#allocation8 + $0x38] sm:$0xff]
    %v191 = vld [vmem:[#allocation8 + $0x40] sm:$0xff]
    %v192 = vld [vmem:[#allocation8 + $0x48] sm:$0xff]
    %v193 = vld [vmem:[#allocation8 + $0x50] sm:$0xff]
    %v194 = vld [vmem:[#allocation8 + $0x58] sm:$0xff]
    %v195 = vld [vmem:[#allocation8 + $0x60] sm:$0xff]
    %v196 = vld [vmem:[#allocation8 + $0x68] sm:$0xff]
    %v197 = vld [vmem:[#allocation8 + $0x70] sm:$0xff]
    %v198 = vld [vmem:[#allocation8 + $0x78] sm:$0xff]
    %v199 = vld [vmem:[%s2 + $0x1] sm:$0x1]
    %v200 = vlaneseq
    %v201 = vshrl.u32 %v200, 7
    %v202 = vsub.s32 0, %v201
    %v203 = vrot.slane %v199, %v202
    %204 = vmatprep.subr.mxu0 0.0
    %205 = vmatpush1.msra.mxu0 %v183
    %206 = vmatprep.subr.mxu0 0.0
    %207 = vmatpush1.msra.mxu0 %v184
    %208 = vmatprep.subr.mxu0 0.0
    %209 = vmatpush1.msra.mxu0 %v185
    %210 = vmatprep.subr.mxu0 0.0
    %211 = vmatpush1.msra.mxu0 %v186
    %212 = vmatprep.subr.mxu0 0.0
    %213 = vmatpush1.msra.mxu0 %v187
    %214 = vmatprep.subr.mxu0 0.0
    %215 = vmatpush1.msra.mxu0 %v188
    %216 = vmatprep.subr.mxu0 0.0
    %217 = vmatpush1.msra.mxu0 %v189
    %218 = vmatprep.subr.mxu0 0.0
    %219 = vmatpush1.msra.mxu0 %v190
    %220 = vmatprep.subr.mxu0 0.0
    %221 = vmatpush1.msra.mxu0 %v191
    %222 = vmatprep.subr.mxu0 0.0
    %223 = vmatpush1.msra.mxu0 %v192
    %224 = vmatprep.subr.mxu0 0.0
    %225 = vmatpush1.msra.mxu0 %v193
    %226 = vmatprep.subr.mxu0 0.0
    %227 = vmatpush1.msra.mxu0 %v194
    %228 = vmatprep.subr.mxu0 0.0
    %229 = vmatpush1.msra.mxu0 %v195
    %230 = vmatprep.subr.mxu0 0.0
    %231 = vmatpush1.msra.mxu0 %v196
    %232 = vmatprep.subr.mxu0 0.0
    %233 = vmatpush1.msra.mxu0 %v197
    %234 = vmatprep.subr.mxu0 0.0
    %235 = vmatpush1.msra.mxu0 %v198
    %236 = vmatprep.subr.mxu0 0.0
    %237 = vmatpush1.msra.mxu0 0.0
    %238 = vmatprep.subr.mxu0 0.0
    %239 = vmatpush1.msra.mxu0 0.0
    %240 = vmatprep.subr.mxu0 0.0
    %241 = vmatpush1.msra.mxu0 0.0
    %242 = vmatprep.subr.mxu0 0.0
    %243 = vmatpush1.msra.mxu0 0.0
    %244 = vmatprep.subr.mxu0 0.0
    %245 = vmatpush1.msra.mxu0 0.0
    %246 = vmatprep.subr.mxu0 0.0
    %247 = vmatpush1.msra.mxu0 0.0
    %248 = vmatprep.subr.mxu0 0.0
    %249 = vmatpush1.msra.mxu0 0.0
    %250 = vmatprep.subr.mxu0 0.0
    %251 = vmatpush1.msra.mxu0 0.0
    %252 = vmatprep.subr.mxu0 0.0
    %253 = vmatpush1.msra.mxu0 0.0
    %254 = vmatprep.subr.mxu0 0.0
    %255 = vmatpush1.msra.mxu0 0.0
    %256 = vmatprep.subr.mxu0 0.0
    %257 = vmatpush1.msra.mxu0 0.0
    %258 = vmatprep.subr.mxu0 0.0
    %259 = vmatpush1.msra.mxu0 0.0
    %260 = vmatprep.subr.mxu0 0.0
    %261 = vmatpush1.msra.mxu0 0.0
    %262 = vmatprep.subr.mxu0 0.0
    %263 = vmatpush1.msra.mxu0 0.0
    %264 = vmatprep.subr.mxu0 0.0
    %265 = vmatpush1.msra.mxu0 0.0
    %266 = vmatprep.subr.mxu0 0.0
    %267 = vmatpush1.msra.mxu0 0.0
    %268 = vmatprep.mubr.f32.mxu0 0.0
    %269 = vmatmul.mubr.f32.gmra.mrb[0].mxu0 %v181
    %v270 = vpop.f32.mrb[0].mxu0
    %v271 = vadd.f32 %v203, %v270
    %v272 = vpop.f32.mrb[0].mxu0
    %273 = vmatprep.mubr.f32.mxu0 0.0
    %274 = vmatmul.mubr.f32.gmra.mrb[0].mxu0 %v182
    %v275 = vpop.f32.mrb[0].mxu0
    %v276 = vadd.f32 %v203, %v275
    %v277 = vpop.f32.mrb[0].mxu0
    %278 = vdwg.mxu0
    %v279 = vmax.f32 %v271, 0.0
    %v280 = vmax.f32 %v276, 0.0
    %v281 = vld [vmem:[#allocation9] sm:$0xff]
    %v282 = vld [vmem:[#allocation9 + $0x8] sm:$0xff]
    %v283 = vld [vmem:[#allocation9 + $0x10] sm:$0xff]
    %v284 = vld [vmem:[#allocation9 + $0x18] sm:$0xff]
    %v285 = vld [vmem:[#allocation9 + $0x20] sm:$0xff]
    %v286 = vld [vmem:[#allocation9 + $0x28] sm:$0xff]
    %v287 = vld [vmem:[#allocation9 + $0x30] sm:$0xff]
    %v288 = vld [vmem:[#allocation9 + $0x38] sm:$0xff]
    %v289 = vld [vmem:[#allocation9 + $0x40] sm:$0xff]
    %v290 = vld [vmem:[#allocation9 + $0x48] sm:$0xff]
    %v291 = vld [vmem:[#allocation9 + $0x50] sm:$0xff]
    %v292 = vld [vmem:[#allocation9 + $0x58] sm:$0xff]
    %v293 = vld [vmem:[#allocation9 + $0x60] sm:$0xff]
    %v294 = vld [vmem:[#allocation9 + $0x68] sm:$0xff]
    %v295 = vld [vmem:[#allocation9 + $0x70] sm:$0xff]
    %v296 = vld [vmem:[#allocation9 + $0x78] sm:$0xff]
    %v297 = vld [vmem:[%s5] sm:$0x1]
    %v299 = vlaneseq
    %v300 = vshrl.u32 %v299, 7
    %v301 = vsub.s32 0, %v300
    %v302 = vrot.slane %v297, %v301
    %304 = vmatprep.subr.mxu0 0.0
    %305 = vmatpush1.msra.mxu0 %v281
    %306 = vmatprep.subr.mxu0 0.0
    %307 = vmatpush1.msra.mxu0 %v282
    %308 = vmatprep.subr.mxu0 0.0
    %309 = vmatpush1.msra.mxu0 %v283
    %310 = vmatprep.subr.mxu0 0.0
    %311 = vmatpush1.msra.mxu0 %v284
    %312 = vmatprep.subr.mxu0 0.0
    %313 = vmatpush1.msra.mxu0 %v285
    %314 = vmatprep.subr.mxu0 0.0
    %315 = vmatpush1.msra.mxu0 %v286
    %316 = vmatprep.subr.mxu0 0.0
    %317 = vmatpush1.msra.mxu0 %v287
    %318 = vmatprep.subr.mxu0 0.0
    %319 = vmatpush1.msra.mxu0 %v288
    %320 = vmatprep.subr.mxu0 0.0
    %321 = vmatpush1.msra.mxu0 %v289
    %322 = vmatprep.subr.mxu0 0.0
    %323 = vmatpush1.msra.mxu0 %v290
    %324 = vmatprep.subr.mxu0 0.0
    %325 = vmatpush1.msra.mxu0 %v291
    %326 = vmatprep.subr.mxu0 0.0
    %327 = vmatpush1.msra.mxu0 %v292
    %328 = vmatprep.subr.mxu0 0.0
    %329 = vmatpush1.msra.mxu0 %v293
    %330 = vmatprep.subr.mxu0 0.0
    %331 = vmatpush1.msra.mxu0 %v294
    %332 = vmatprep.subr.mxu0 0.0
    %333 = vmatpush1.msra.mxu0 %v295
    %334 = vmatprep.subr.mxu0 0.0
    %335 = vmatpush1.msra.mxu0 %v296
    %336 = vmatprep.subr.mxu0 0.0
    %337 = vmatpush1.msra.mxu0 0.0
    %338 = vmatprep.subr.mxu0 0.0
    %339 = vmatpush1.msra.mxu0 0.0
    %340 = vmatprep.subr.mxu0 0.0
    %341 = vmatpush1.msra.mxu0 0.0
    %342 = vmatprep.subr.mxu0 0.0
    %343 = vmatpush1.msra.mxu0 0.0
    %344 = vmatprep.subr.mxu0 0.0
    %345 = vmatpush1.msra.mxu0 0.0
    %346 = vmatprep.subr.mxu0 0.0
    %347 = vmatpush1.msra.mxu0 0.0
    %348 = vmatprep.subr.mxu0 0.0
    %349 = vmatpush1.msra.mxu0 0.0
    %350 = vmatprep.subr.mxu0 0.0
    %351 = vmatpush1.msra.mxu0 0.0
    %352 = vmatprep.subr.mxu0 0.0
    %353 = vmatpush1.msra.mxu0 0.0
    %354 = vmatprep.subr.mxu0 0.0
    %355 = vmatpush1.msra.mxu0 0.0
    %356 = vmatprep.subr.mxu0 0.0
    %357 = vmatpush1.msra.mxu0 0.0
    %358 = vmatprep.subr.mxu0 0.0
    %359 = vmatpush1.msra.mxu0 0.0
    %360 = vmatprep.subr.mxu0 0.0
    %361 = vmatpush1.msra.mxu0 0.0
    %362 = vmatprep.subr.mxu0 0.0
    %363 = vmatpush1.msra.mxu0 0.0
    %364 = vmatprep.subr.mxu0 0.0
    %365 = vmatpush1.msra.mxu0 0.0
    %366 = vmatprep.subr.mxu0 0.0
    %367 = vmatpush1.msra.mxu0 0.0
    %368 = vmatprep.mubr.f32.mxu0 0.0
    %369 = vmatmul.mubr.f32.gmra.mrb[0].mxu0 %v279
    %v370 = vpop.f32.mrb[0].mxu0
    %v371 = vadd.f32 %v302, %v370
    %v372 = vpop.f32.mrb[0].mxu0
    %373 = vmatprep.mubr.f32.mxu0 0.0
    %374 = vmatmul.mubr.f32.gmra.mrb[0].mxu0 %v280
    %v375 = vpop.f32.mrb[0].mxu0
    %v376 = vadd.f32 %v302, %v375
    %v377 = vpop.f32.mrb[0].mxu0
    %378 = vdwg.mxu0
    %s379 = sld [smem:[#allocation2]]
    %v380 = vstv %s379
    %v381 = vmul.f32 %v380, %v83
    %v382 = vmul.f32 %v380, %v84
    %v383 = vadd.f32 %v371, %v381
    %v384 = vadd.f32 %v376, %v382
    %385 = vst [vmem:[#allocation11] sm:$0xff] %v383
    %386 = vst [vmem:[#allocation11 + $0x8] sm:$0xff] %v384
    // Predicated region
    $region46: #{tpu_custom_call.1} parent=1 // pred_check
      _
    $region47: #{tpu_custom_call.1} parent=1 // pred_check_branch
      %388 = sbr.rel (0) target = $region49
    $region48: #{tpu_custom_call.1} parent=1 // pred_region
      %s390 = ssub.s32 256, 256
      %391 = vsyncadd [#allocation5], %s390
      %s392 = sshll.u32 [#allocation11], 4
      %s393 = int_to_ptr.vmem [resolvable:$true] %s392
      %398 = dma.vmem_to_hbm [thread:$0]  %s393, 256, %s7, [#allocation5], 128, 128, 8
    $region49: #{tpu_custom_call.1} parent=1 // pred_fallthru
      _
    // Predicated region
    $region50: #{tpu_custom_call.1} parent=1 // pred_check
      _
    $region51: #{tpu_custom_call.1} parent=1 // pred_check_branch
      %400 = sbr.rel (0) target = $region53
    $region52: #{tpu_custom_call.1} parent=1 // pred_region
      %401 = dma.done [#allocation5], 256
    $region53: #{tpu_custom_call.1} parent=1 // pred_fallthru
      _
    %402 = vsyncpa [#allocation4], 1
    %403 = vsyncpa [#allocation7], 1
    %404 = vsyncpa [#allocation10], 1
    %405 = vsyncpa [#allocation5], 1

// kernel: tpu_custom_call.1
$region0: #{tpu_custom_call.1}
  #allocation0 [shape = 'u32[]', space=smem, size = 0x4, offset = 0x4, fixed_abs, tag = 'smem constant byte address 0x4 - core index']
  #allocation1 [shape = 'u32[144,128]{1,0:T(1,128)}', space=vmem, size = 0x12000, scoped, tag = 'internal scratch']
  #allocation2 [shape = 'f32[1,1]{1,0:T(1,128)S(6)}', space=smem, size = 0x200, scoped, tag = 'scoped memory for tpu_custom_call.1']
  %s0 = inlined_call_operand.hbm [shape: f32[16,128], index: 0, kind: input, shape index: {}]
  %s1 = inlined_call_operand.hbm [shape: f32[128,128], index: 1, kind: input, shape index: {}]
  %s2 = inlined_call_operand.vmem [shape: f32[2,128], index: 2, kind: input, shape index: {}]
  %s3 = inlined_call_operand.hbm [shape: f32[128,128], index: 3, kind: input, shape index: {}]
  %s4 = inlined_call_operand.hbm [shape: f32[128,128], index: 4, kind: input, shape index: {}]
  %s5 = inlined_call_operand.vmem [shape: f32[1,128], index: 5, kind: input, shape index: {}]
  %s6 = inlined_call_operand.<no memory space> [shape: f32[1,1], index: 6, kind: input, shape index: {}]
  %s7 = inlined_call_operand.hbm [shape: f32[16,128], index: 7, kind: output, shape index: {}]
  %s8 = sld [smem:[#allocation0]]
  $region54: #{tpu_custom_call.1} parent=0
    _
  %s10 = ssub.s32 1, %s8
  %s11 = scalar_select 0, %s10, %s8
  %12 = sst [smem:[#allocation2]] %s6
  $region1: #{tpu_custom_call.1} parent=0
    #allocation3 [shape = 'u8[8192]{0}', space=vmem, size = 0x2000, scoped, tag = 'input window, operand 0, single buffered']
    #allocation4 [shape = 's32[1]{0}', space=sflag, size = 0x4, scoped, tag = 'scoped memory for tpu_custom_call.1']
    #allocation5 [shape = 's32[1]{0}', space=sflag, size = 0x4, scoped, tag = 'scoped memory for tpu_custom_call.1']
    #allocation6 [shape = 'u8[65536]{0}', space=vmem, size = 0x10000, scoped, tag = 'input window, operand 1, single buffered']
    #allocation7 [shape = 's32[1]{0}', space=sflag, size = 0x4, scoped, tag = 'scoped memory for tpu_custom_call.1']
    #allocation8 [shape = 'u8[65536]{0}', space=vmem, size = 0x10000, scoped, tag = 'input window, operand 3, single buffered']
    #allocation9 [shape = 'u8[65536]{0}', space=vmem, size = 0x10000, scoped, tag = 'input window, operand 4, single buffered']
    #allocation10 [shape = 's32[1]{0}', space=sflag, size = 0x4, scoped, tag = 'scoped memory for tpu_custom_call.1']
    #allocation11 [shape = 'u8[8192]{0}', space=vmem, size = 0x2000, scoped, tag = 'output window, operand 0, single buffered']
    %13 = vsyncpa [#allocation4], 0
    %14 = vsyncpa [#allocation7], 0
    %15 = vsyncpa [#allocation10], 0
    %16 = vsyncpa [#allocation5], 0
    // Predicated region
    $region2: #{tpu_custom_call.1} parent=1 // pred_check
      _
    $region3: #{tpu_custom_call.1} parent=1 // pred_check_branch
      %18 = sbr.rel (0) target = $region5
    $region4: #{tpu_custom_call.1} parent=1 // pred_region
      %s20 = ssub.s32 256, 256
      %21 = vsyncadd [#allocation4], %s20
      %s22 = sshll.u32 [#allocation3], 4
      %s23 = int_to_ptr.vmem [resolvable:$true] %s22
      %28 = dma.hbm_to_vmem [thread:$0]  %s0, 256, %s23, [#allocation4], 128, 128, 8
    $region5: #{tpu_custom_call.1} parent=1 // pred_fallthru
      _
    // Predicated region
    $region6: #{tpu_custom_call.1} parent=1 // pred_check
      _
    $region7: #{tpu_custom_call.1} parent=1 // pred_check_branch
      %30 = sbr.rel (0) target = $region9
    $region8: #{tpu_custom_call.1} parent=1 // pred_region
      %s32 = ssub.s32 2048, 2048
      %33 = vsyncadd [#allocation7], %s32
      %s34 = sshll.u32 [#allocation6], 4
      %s35 = int_to_ptr.vmem [resolvable:$true] %s34
      %40 = dma.hbm_to_vmem [thread:$0]  %s1, 2048, %s35, [#allocation7], 128, 128, 8
    $region9: #{tpu_custom_call.1} parent=1 // pred_fallthru
      _
    // Predicated region
    $region10: #{tpu_custom_call.1} parent=1 // pred_check
      _
    $region11: #{tpu_custom_call.1} parent=1 // pred_check_branch
      %42 = sbr.rel (0) target = $region13
    $region12: #{tpu_custom_call.1} parent=1 // pred_region
      _
    $region13: #{tpu_custom_call.1} parent=1 // pred_fallthru
      _
    // Predicated region
    $region14: #{tpu_custom_call.1} parent=1 // pred_check
      _
    $region15: #{tpu_custom_call.1} parent=1 // pred_check_branch
      %44 = sbr.rel (0) target = $region17
    $region16: #{tpu_custom_call.1} parent=1 // pred_region
      %s46 = ssub.s32 2048, 2048
      %47 = vsyncadd [#allocation7], %s46
      %s48 = sshll.u32 [#allocation8], 4
      %s49 = int_to_ptr.vmem [resolvable:$true] %s48
      %54 = dma.hbm_to_vmem [thread:$0]  %s3, 2048, %s49, [#allocation7], 128, 128, 8
    $region17: #{tpu_custom_call.1} parent=1 // pred_fallthru
      _
    // Predicated region
    $region18: #{tpu_custom_call.1} parent=1 // pred_check
      _
    $region19: #{tpu_custom_call.1} parent=1 // pred_check_branch
      %56 = sbr.rel (0) target = $region21
    $region20: #{tpu_custom_call.1} parent=1 // pred_region
      %s58 = ssub.s32 2048, 2048
      %59 = vsyncadd [#allocation10], %s58
      %s60 = sshll.u32 [#allocation9], 4
      %s61 = int_to_ptr.vmem [resolvable:$true] %s60
      %66 = dma.hbm_to_vmem [thread:$0]  %s4, 2048, %s61, [#allocation10], 128, 128, 8
    $region21: #{tpu_custom_call.1} parent=1 // pred_fallthru
      _
    // Predicated region
    $region22: #{tpu_custom_call.1} parent=1 // pred_check
      _
    $region23: #{tpu_custom_call.1} parent=1 // pred_check_branch
      %68 = sbr.rel (0) target = $region25
    $region24: #{tpu_custom_call.1} parent=1 // pred_region
      _
    $region25: #{tpu_custom_call.1} parent=1 // pred_fallthru
      _
    // Predicated region
    $region26: #{tpu_custom_call.1} parent=1 // pred_check
      _
    $region27: #{tpu_custom_call.1} parent=1 // pred_check_branch
      %70 = sbr.rel (0) target = $region29
    $region28: #{tpu_custom_call.1} parent=1 // pred_region
      _
    $region29: #{tpu_custom_call.1} parent=1 // pred_fallthru
      _
    // Predicated region
    $region30: #{tpu_custom_call.1} parent=1 // pred_check
      _
    $region31: #{tpu_custom_call.1} parent=1 // pred_check_branch
      %72 = sbr.rel (0) target = $region33
    $region32: #{tpu_custom_call.1} parent=1 // pred_region
      %73 = dma.done [#allocation4], 256
    $region33: #{tpu_custom_call.1} parent=1 // pred_fallthru
      _
    // Predicated region
    $region34: #{tpu_custom_call.1} parent=1 // pred_check
      _
    $region35: #{tpu_custom_call.1} parent=1 // pred_check_branch
      %75 = sbr.rel (0) target = $region37
    $region36: #{tpu_custom_call.1} parent=1 // pred_region
      %76 = dma.done [#allocation7], 2048
    $region37: #{tpu_custom_call.1} parent=1 // pred_fallthru
      _
    // Predicated region
    $region38: #{tpu_custom_call.1} parent=1 // pred_check
      _
    $region39: #{tpu_custom_call.1} parent=1 // pred_check_branch
      %78 = sbr.rel (0) target = $region41
    $region40: #{tpu_custom_call.1} parent=1 // pred_region
      %79 = dma.done [#allocation7], 2048
    $region41: #{tpu_custom_call.1} parent=1 // pred_fallthru
      _
    // Predicated region
    $region42: #{tpu_custom_call.1} parent=1 // pred_check
      _
    $region43: #{tpu_custom_call.1} parent=1 // pred_check_branch
      %81 = sbr.rel (0) target = $region45
    $region44: #{tpu_custom_call.1} parent=1 // pred_region
      %82 = dma.done [#allocation10], 2048
    $region45: #{tpu_custom_call.1} parent=1 // pred_fallthru
      _
    %v83 = vld [vmem:[#allocation3] sm:$0xff]
    %v84 = vld [vmem:[#allocation3 + $0x8] sm:$0xff]
    %v85 = vld [vmem:[#allocation6] sm:$0xff]
    %v86 = vld [vmem:[#allocation6 + $0x8] sm:$0xff]
    %v87 = vld [vmem:[#allocation6 + $0x10] sm:$0xff]
    %v88 = vld [vmem:[#allocation6 + $0x18] sm:$0xff]
    %v89 = vld [vmem:[#allocation6 + $0x20] sm:$0xff]
    %v90 = vld [vmem:[#allocation6 + $0x28] sm:$0xff]
    %v91 = vld [vmem:[#allocation6 + $0x30] sm:$0xff]
    %v92 = vld [vmem:[#allocation6 + $0x38] sm:$0xff]
    %v93 = vld [vmem:[#allocation6 + $0x40] sm:$0xff]
    %v94 = vld [vmem:[#allocation6 + $0x48] sm:$0xff]
    %v95 = vld [vmem:[#allocation6 + $0x50] sm:$0xff]
    %v96 = vld [vmem:[#allocation6 + $0x58] sm:$0xff]
    %v97 = vld [vmem:[#allocation6 + $0x60] sm:$0xff]
    %v98 = vld [vmem:[#allocation6 + $0x68] sm:$0xff]
    %v99 = vld [vmem:[#allocation6 + $0x70] sm:$0xff]
    %v100 = vld [vmem:[#allocation6 + $0x78] sm:$0xff]
    %v101 = vld [vmem:[%s2] sm:$0x1]
    %v102 = vlaneseq
    %v103 = vshrl.u32 %v102, 7
    %v104 = vsub.s32 0, %v103
    %v105 = vrot.slane %v101, %v104
    %106 = vmatprep.subr.mxu0 0.0
    %107 = vmatpush1.msra.mxu0 %v85
    %108 = vmatprep.subr.mxu0 0.0
    %109 = vmatpush1.msra.mxu0 %v86
    %110 = vmatprep.subr.mxu0 0.0
    %111 = vmatpush1.msra.mxu0 %v87
    %112 = vmatprep.subr.mxu0 0.0
    %113 = vmatpush1.msra.mxu0 %v88
    %114 = vmatprep.subr.mxu0 0.0
    %115 = vmatpush1.msra.mxu0 %v89
    %116 = vmatprep.subr.mxu0 0.0
    %117 = vmatpush1.msra.mxu0 %v90
    %118 = vmatprep.subr.mxu0 0.0
    %119 = vmatpush1.msra.mxu0 %v91
    %120 = vmatprep.subr.mxu0 0.0
    %121 = vmatpush1.msra.mxu0 %v92
    %122 = vmatprep.subr.mxu0 0.0
    %123 = vmatpush1.msra.mxu0 %v93
    %124 = vmatprep.subr.mxu0 0.0
    %125 = vmatpush1.msra.mxu0 %v94
    %126 = vmatprep.subr.mxu0 0.0
    %127 = vmatpush1.msra.mxu0 %v95
    %128 = vmatprep.subr.mxu0 0.0
    %129 = vmatpush1.msra.mxu0 %v96
    %130 = vmatprep.subr.mxu0 0.0
    %131 = vmatpush1.msra.mxu0 %v97
    %132 = vmatprep.subr.mxu0 0.0
    %133 = vmatpush1.msra.mxu0 %v98
    %134 = vmatprep.subr.mxu0 0.0
    %135 = vmatpush1.msra.mxu0 %v99
    %136 = vmatprep.subr.mxu0 0.0
    %137 = vmatpush1.msra.mxu0 %v100
    %138 = vmatprep.subr.mxu0 0.0
    %139 = vmatpush1.msra.mxu0 0.0
    %140 = vmatprep.subr.mxu0 0.0
    %141 = vmatpush1.msra.mxu0 0.0
    %142 = vmatprep.subr.mxu0 0.0
    %143 = vmatpush1.msra.mxu0 0.0
    %144 = vmatprep.subr.mxu0 0.0
    %145 = vmatpush1.msra.mxu0 0.0
    %146 = vmatprep.subr.mxu0 0.0
    %147 = vmatpush1.msra.mxu0 0.0
    %148 = vmatprep.subr.mxu0 0.0
    %149 = vmatpush1.msra.mxu0 0.0
    %150 = vmatprep.subr.mxu0 0.0
    %151 = vmatpush1.msra.mxu0 0.0
    %152 = vmatprep.subr.mxu0 0.0
    %153 = vmatpush1.msra.mxu0 0.0
    %154 = vmatprep.subr.mxu0 0.0
    %155 = vmatpush1.msra.mxu0 0.0
    %156 = vmatprep.subr.mxu0 0.0
    %157 = vmatpush1.msra.mxu0 0.0
    %158 = vmatprep.subr.mxu0 0.0
    %159 = vmatpush1.msra.mxu0 0.0
    %160 = vmatprep.subr.mxu0 0.0
    %161 = vmatpush1.msra.mxu0 0.0
    %162 = vmatprep.subr.mxu0 0.0
    %163 = vmatpush1.msra.mxu0 0.0
    %164 = vmatprep.subr.mxu0 0.0
    %165 = vmatpush1.msra.mxu0 0.0
    %166 = vmatprep.subr.mxu0 0.0
    %167 = vmatpush1.msra.mxu0 0.0
    %168 = vmatprep.subr.mxu0 0.0
    %169 = vmatpush1.msra.mxu0 0.0
    %170 = vmatprep.mubr.f32.mxu0 0.0
    %171 = vmatmul.mubr.f32.gmra.mrb[0].mxu0 %v83
    %v172 = vpop.f32.mrb[0].mxu0
    %v173 = vadd.f32 %v105, %v172
    %v174 = vpop.f32.mrb[0].mxu0
    %175 = vmatprep.mubr.f32.mxu0 0.0
    %176 = vmatmul.mubr.f32.gmra.mrb[0].mxu0 %v84
    %v177 = vpop.f32.mrb[0].mxu0
    %v178 = vadd.f32 %v105, %v177
    %v179 = vpop.f32.mrb[0].mxu0
    %180 = vdwg.mxu0
    %v181 = vmax.f32 %v173, 0.0
    %v182 = vmax.f32 %v178, 0.0
    %v183 = vld [vmem:[#allocation8] sm:$0xff]
    %v184 = vld [vmem:[#allocation8 + $0x8] sm:$0xff]
    %v185 = vld [vmem:[#allocation8 + $0x10] sm:$0xff]
    %v186 = vld [vmem:[#allocation8 + $0x18] sm:$0xff]
    %v187 = vld [vmem:[#allocation8 + $0x20] sm:$0xff]
    %v188 = vld [vmem:[#allocation8 + $0x28] sm:$0xff]
    %v189 = vld [vmem:[#allocation8 + $0x30] sm:$0xff]
    %v190 = vld [vmem:[#allocation8 + $0x38] sm:$0xff]
    %v191 = vld [vmem:[#allocation8 + $0x40] sm:$0xff]
    %v192 = vld [vmem:[#allocation8 + $0x48] sm:$0xff]
    %v193 = vld [vmem:[#allocation8 + $0x50] sm:$0xff]
    %v194 = vld [vmem:[#allocation8 + $0x58] sm:$0xff]
    %v195 = vld [vmem:[#allocation8 + $0x60] sm:$0xff]
    %v196 = vld [vmem:[#allocation8 + $0x68] sm:$0xff]
    %v197 = vld [vmem:[#allocation8 + $0x70] sm:$0xff]
    %v198 = vld [vmem:[#allocation8 + $0x78] sm:$0xff]
    %v199 = vld [vmem:[%s2 + $0x1] sm:$0x1]
    %v200 = vlaneseq
    %v201 = vshrl.u32 %v200, 7
    %v202 = vsub.s32 0, %v201
    %v203 = vrot.slane %v199, %v202
    %204 = vmatprep.subr.mxu0 0.0
    %205 = vmatpush1.msra.mxu0 %v183
    %206 = vmatprep.subr.mxu0 0.0
    %207 = vmatpush1.msra.mxu0 %v184
    %208 = vmatprep.subr.mxu0 0.0
    %209 = vmatpush1.msra.mxu0 %v185
    %210 = vmatprep.subr.mxu0 0.0
    %211 = vmatpush1.msra.mxu0 %v186
    %212 = vmatprep.subr.mxu0 0.0
    %213 = vmatpush1.msra.mxu0 %v187
    %214 = vmatprep.subr.mxu0 0.0
    %215 = vmatpush1.msra.mxu0 %v188
    %216 = vmatprep.subr.mxu0 0.0
    %217 = vmatpush1.msra.mxu0 %v189
    %218 = vmatprep.subr.mxu0 0.0
    %219 = vmatpush1.msra.mxu0 %v190
    %220 = vmatprep.subr.mxu0 0.0
    %221 = vmatpush1.msra.mxu0 %v191
    %222 = vmatprep.subr.mxu0 0.0
    %223 = vmatpush1.msra.mxu0 %v192
    %224 = vmatprep.subr.mxu0 0.0
    %225 = vmatpush1.msra.mxu0 %v193
    %226 = vmatprep.subr.mxu0 0.0
    %227 = vmatpush1.msra.mxu0 %v194
    %228 = vmatprep.subr.mxu0 0.0
    %229 = vmatpush1.msra.mxu0 %v195
    %230 = vmatprep.subr.mxu0 0.0
    %231 = vmatpush1.msra.mxu0 %v196
    %232 = vmatprep.subr.mxu0 0.0
    %233 = vmatpush1.msra.mxu0 %v197
    %234 = vmatprep.subr.mxu0 0.0
    %235 = vmatpush1.msra.mxu0 %v198
    %236 = vmatprep.subr.mxu0 0.0
    %237 = vmatpush1.msra.mxu0 0.0
    %238 = vmatprep.subr.mxu0 0.0
    %239 = vmatpush1.msra.mxu0 0.0
    %240 = vmatprep.subr.mxu0 0.0
    %241 = vmatpush1.msra.mxu0 0.0
    %242 = vmatprep.subr.mxu0 0.0
    %243 = vmatpush1.msra.mxu0 0.0
    %244 = vmatprep.subr.mxu0 0.0
    %245 = vmatpush1.msra.mxu0 0.0
    %246 = vmatprep.subr.mxu0 0.0
    %247 = vmatpush1.msra.mxu0 0.0
    %248 = vmatprep.subr.mxu0 0.0
    %249 = vmatpush1.msra.mxu0 0.0
    %250 = vmatprep.subr.mxu0 0.0
    %251 = vmatpush1.msra.mxu0 0.0
    %252 = vmatprep.subr.mxu0 0.0
    %253 = vmatpush1.msra.mxu0 0.0
    %254 = vmatprep.subr.mxu0 0.0
    %255 = vmatpush1.msra.mxu0 0.0
    %256 = vmatprep.subr.mxu0 0.0
    %257 = vmatpush1.msra.mxu0 0.0
    %258 = vmatprep.subr.mxu0 0.0
    %259 = vmatpush1.msra.mxu0 0.0
    %260 = vmatprep.subr.mxu0 0.0
    %261 = vmatpush1.msra.mxu0 0.0
    %262 = vmatprep.subr.mxu0 0.0
    %263 = vmatpush1.msra.mxu0 0.0
    %264 = vmatprep.subr.mxu0 0.0
    %265 = vmatpush1.msra.mxu0 0.0
    %266 = vmatprep.subr.mxu0 0.0
    %267 = vmatpush1.msra.mxu0 0.0
    %268 = vmatprep.mubr.f32.mxu0 0.0
    %269 = vmatmul.mubr.f32.gmra.mrb[0].mxu0 %v181
    %v270 = vpop.f32.mrb[0].mxu0
    %v271 = vadd.f32 %v203, %v270
    %v272 = vpop.f32.mrb[0].mxu0
    %273 = vmatprep.mubr.f32.mxu0 0.0
    %274 = vmatmul.mubr.f32.gmra.mrb[0].mxu0 %v182
    %v275 = vpop.f32.mrb[0].mxu0
    %v276 = vadd.f32 %v203, %v275
    %v277 = vpop.f32.mrb[0].mxu0
    %278 = vdwg.mxu0
    %v279 = vmax.f32 %v271, 0.0
    %v280 = vmax.f32 %v276, 0.0
    %v281 = vld [vmem:[#allocation9] sm:$0xff]
    %v282 = vld [vmem:[#allocation9 + $0x8] sm:$0xff]
    %v283 = vld [vmem:[#allocation9 + $0x10] sm:$0xff]
    %v284 = vld [vmem:[#allocation9 + $0x18] sm:$0xff]
    %v285 = vld [vmem:[#allocation9 + $0x20] sm:$0xff]
    %v286 = vld [vmem:[#allocation9 + $0x28] sm:$0xff]
    %v287 = vld [vmem:[#allocation9 + $0x30] sm:$0xff]
    %v288 = vld [vmem:[#allocation9 + $0x38] sm:$0xff]
    %v289 = vld [vmem:[#allocation9 + $0x40] sm:$0xff]
    %v290 = vld [vmem:[#allocation9 + $0x48] sm:$0xff]
    %v291 = vld [vmem:[#allocation9 + $0x50] sm:$0xff]
    %v292 = vld [vmem:[#allocation9 + $0x58] sm:$0xff]
    %v293 = vld [vmem:[#allocation9 + $0x60] sm:$0xff]
    %v294 = vld [vmem:[#allocation9 + $0x68] sm:$0xff]
    %v295 = vld [vmem:[#allocation9 + $0x70] sm:$0xff]
    %v296 = vld [vmem:[#allocation9 + $0x78] sm:$0xff]
    %v297 = vld [vmem:[%s5] sm:$0x1]
    %v299 = vlaneseq
    %v300 = vshrl.u32 %v299, 7
    %v301 = vsub.s32 0, %v300
    %v302 = vrot.slane %v297, %v301
    %304 = vmatprep.subr.mxu0 0.0
    %305 = vmatpush1.msra.mxu0 %v281
    %306 = vmatprep.subr.mxu0 0.0
    %307 = vmatpush1.msra.mxu0 %v282
    %308 = vmatprep.subr.mxu0 0.0
    %309 = vmatpush1.msra.mxu0 %v283
    %310 = vmatprep.subr.mxu0 0.0
    %311 = vmatpush1.msra.mxu0 %v284
    %312 = vmatprep.subr.mxu0 0.0
    %313 = vmatpush1.msra.mxu0 %v285
    %314 = vmatprep.subr.mxu0 0.0
    %315 = vmatpush1.msra.mxu0 %v286
    %316 = vmatprep.subr.mxu0 0.0
    %317 = vmatpush1.msra.mxu0 %v287
    %318 = vmatprep.subr.mxu0 0.0
    %319 = vmatpush1.msra.mxu0 %v288
    %320 = vmatprep.subr.mxu0 0.0
    %321 = vmatpush1.msra.mxu0 %v289
    %322 = vmatprep.subr.mxu0 0.0
    %323 = vmatpush1.msra.mxu0 %v290
    %324 = vmatprep.subr.mxu0 0.0
    %325 = vmatpush1.msra.mxu0 %v291
    %326 = vmatprep.subr.mxu0 0.0
    %327 = vmatpush1.msra.mxu0 %v292
    %328 = vmatprep.subr.mxu0 0.0
    %329 = vmatpush1.msra.mxu0 %v293
    %330 = vmatprep.subr.mxu0 0.0
    %331 = vmatpush1.msra.mxu0 %v294
    %332 = vmatprep.subr.mxu0 0.0
    %333 = vmatpush1.msra.mxu0 %v295
    %334 = vmatprep.subr.mxu0 0.0
    %335 = vmatpush1.msra.mxu0 %v296
    %336 = vmatprep.subr.mxu0 0.0
    %337 = vmatpush1.msra.mxu0 0.0
    %338 = vmatprep.subr.mxu0 0.0
    %339 = vmatpush1.msra.mxu0 0.0
    %340 = vmatprep.subr.mxu0 0.0
    %341 = vmatpush1.msra.mxu0 0.0
    %342 = vmatprep.subr.mxu0 0.0
    %343 = vmatpush1.msra.mxu0 0.0
    %344 = vmatprep.subr.mxu0 0.0
    %345 = vmatpush1.msra.mxu0 0.0
    %346 = vmatprep.subr.mxu0 0.0
    %347 = vmatpush1.msra.mxu0 0.0
    %348 = vmatprep.subr.mxu0 0.0
    %349 = vmatpush1.msra.mxu0 0.0
    %350 = vmatprep.subr.mxu0 0.0
    %351 = vmatpush1.msra.mxu0 0.0
    %352 = vmatprep.subr.mxu0 0.0
    %353 = vmatpush1.msra.mxu0 0.0
    %354 = vmatprep.subr.mxu0 0.0
    %355 = vmatpush1.msra.mxu0 0.0
    %356 = vmatprep.subr.mxu0 0.0
    %357 = vmatpush1.msra.mxu0 0.0
    %358 = vmatprep.subr.mxu0 0.0
    %359 = vmatpush1.msra.mxu0 0.0
    %360 = vmatprep.subr.mxu0 0.0
    %361 = vmatpush1.msra.mxu0 0.0
    %362 = vmatprep.subr.mxu0 0.0
    %363 = vmatpush1.msra.mxu0 0.0
    %364 = vmatprep.subr.mxu0 0.0
    %365 = vmatpush1.msra.mxu0 0.0
    %366 = vmatprep.subr.mxu0 0.0
    %367 = vmatpush1.msra.mxu0 0.0
    %368 = vmatprep.mubr.f32.mxu0 0.0
    %369 = vmatmul.mubr.f32.gmra.mrb[0].mxu0 %v279
    %v370 = vpop.f32.mrb[0].mxu0
    %v371 = vadd.f32 %v302, %v370
    %v372 = vpop.f32.mrb[0].mxu0
    %373 = vmatprep.mubr.f32.mxu0 0.0
    %374 = vmatmul.mubr.f32.gmra.mrb[0].mxu0 %v280
    %v375 = vpop.f32.mrb[0].mxu0
    %v376 = vadd.f32 %v302, %v375
    %v377 = vpop.f32.mrb[0].mxu0
    %378 = vdwg.mxu0
    %s379 = sld [smem:[#allocation2]]
    %v380 = vstv %s379
    %v381 = vmul.f32 %v380, %v83
    %v382 = vmul.f32 %v380, %v84
    %v383 = vadd.f32 %v371, %v381
    %v384 = vadd.f32 %v376, %v382
    %385 = vst [vmem:[#allocation11] sm:$0xff] %v383
    %386 = vst [vmem:[#allocation11 + $0x8] sm:$0xff] %v384
    // Predicated region
    $region46: #{tpu_custom_call.1} parent=1 // pred_check
      _
    $region47: #{tpu_custom_call.1} parent=1 // pred_check_branch
      %388 = sbr.rel (0) target = $region49
    $region48: #{tpu_custom_call.1} parent=1 // pred_region
      %s390 = ssub.s32 256, 256
      %391 = vsyncadd [#allocation5], %s390
      %s392 = sshll.u32 [#allocation11], 4
      %s393 = int_to_ptr.vmem [resolvable:$true] %s392
      %398 = dma.vmem_to_hbm [thread:$0]  %s393, 256, %s7, [#allocation5], 128, 128, 8
    $region49: #{tpu_custom_call.1} parent=1 // pred_fallthru
      _
    // Predicated region
    $region50: #{tpu_custom_call.1} parent=1 // pred_check
      _
    $region51: #{tpu_custom_call.1} parent=1 // pred_check_branch
      %400 = sbr.rel (0) target = $region53
    $region52: #{tpu_custom_call.1} parent=1 // pred_region
      %401 = dma.done [#allocation5], 256
    $region53: #{tpu_custom_call.1} parent=1 // pred_fallthru
      _
    %402 = vsyncpa [#allocation4], 1
    %403 = vsyncpa [#allocation7], 1
    %404 = vsyncpa [#allocation10], 1
    %405 = vsyncpa [#allocation5], 1

</llo_original>
